<compile_context>
chip_gen: v7x
topology: tpu7x:2x2x1
jax: 0.10.0
libtpu: 0.0.40
codegen_flags: <defaults>
</compile_context>

<pallas_src>
import functools

import jax
import jax.numpy as jnp
from jax.experimental import pallas as pl
from jax.experimental.pallas import tpu as pltpu


# --------------------------- kernels ----------------------------------------

def _masked_mean_kernel(x_ref, w_ref, inv_ref, o_ref, acc_ref, *,
                        n_total, tn, need_tail):
    """Accumulate sum_n x*w over the tiled sequence axis; scale at the end."""
    n = pl.program_id(2)
    last = pl.num_programs(2) - 1

    @pl.when(n == 0)
    def _():
        acc_ref[...] = jnp.zeros_like(acc_ref)

    x = x_ref[...].astype(jnp.float32)            # (tb, tn, td)
    w = w_ref[...][:, :, None]                    # (tb, tn, 1), 0/1 f32

    if need_tail:
        # Only the last N-tile is ragged: keep all other steps on the pure
        # cast·mul·add path and mask the product once on the tail tile.
        @pl.when(n != last)
        def _():
            acc_ref[...] += jnp.sum(x * w, axis=1)

        @pl.when(n == last)
        def _():
            rem = n_total - n * tn
            pos = jax.lax.broadcasted_iota(jnp.int32, x.shape, 1)
            acc_ref[...] += jnp.sum(jnp.where(pos < rem, x * w, 0.0), axis=1)
    else:
        acc_ref[...] += jnp.sum(x * w, axis=1)

    @pl.when(n == last)
    def _():
        # inv == 1/count precomputed in the wrapper; count==0 -> inf/nan,
        # matching the PyTorch semantics for fully-masked rows.
        o_ref[...] = (acc_ref[...] * inv_ref[...]).astype(o_ref.dtype)


def _mean_kernel(x_ref, o_ref, acc_ref, *, n_total, tn, need_tail):
    """Plain mean over the sequence axis (mask=None fast path)."""
    n = pl.program_id(2)
    last = pl.num_programs(2) - 1

    @pl.when(n == 0)
    def _():
        acc_ref[...] = jnp.zeros_like(acc_ref)

    x = x_ref[...].astype(jnp.float32)

    if need_tail:
        @pl.when(n != last)
        def _():
            acc_ref[...] += jnp.sum(x, axis=1)

        @pl.when(n == last)
        def _():
            rem = n_total - n * tn
            pos = jax.lax.broadcasted_iota(jnp.int32, x.shape, 1)
            acc_ref[...] += jnp.sum(jnp.where(pos < rem, x, 0.0), axis=1)
    else:
        acc_ref[...] += jnp.sum(x, axis=1)

    @pl.when(n == last)
    def _():
        o_ref[...] = (acc_ref[...] * (1.0 / float(n_total))).astype(o_ref.dtype)


# --------------------------- wrapper -----------------------------------------

def _round_up(v, m):
    return ((v + m - 1) // m) * m


def _vmem_limit_bytes():
    cap = 128 * 1024 * 1024
    try:
        cap = int(pltpu.get_tpu_info().vmem_capacity_bytes)
    except Exception:
        pass
    # v5e/v6e (128 MiB physical) -> 64 MiB scoped; v7x (64 MiB) -> 48 MiB.
    return min(64 * 1024 * 1024, (3 * cap) // 4)


def _choose_tiles(B, N, D, itemsize, seq_tile, vmem_limit):
    # Batch tile: full extent for tiny B, else 8 (multiple-of-8 legal block);
    # ragged final B-block handled by the cdiv grid + clipped writeback.
    tb = min(B, 8)
    nb = pl.cdiv(B, tb)

    # Split D onto a second "parallel" grid axis only when the batch gives a
    # single parallel block, so v7x's two TensorCores both stream data.
    # tn is sized afterwards from the same byte budget, so single-TC chips see
    # the same per-step block bytes.
    if nb == 1 and D >= 256 and D % 128 == 0:
        td = D // 2 if (D // 2) % 128 == 0 else 128
    else:
        td = D

    if seq_tile is not None:
        tn = min(N, _round_up(max(1, int(seq_tile)), 128))
    else:
        target = min(12 * 1024 * 1024, vmem_limit // 4)   # per x block
        tn = target // max(1, tb * td * itemsize)
        tn = max(128, (tn // 128) * 128)
        tn = min(tn, N)
    if tn >= N:
        tn = N          # full extent (legal regardless of alignment)
    return tb, td, tn


def global_avg_1d(x, mask=None, *, seq_tile=None):
    """Pallas-backed masked mean over the sequence axis (PathLayer 'mean' pool).

    seq_tile: optional sequence-tile override (rounded up to a multiple of 128).
    """
    x = jnp.asarray(x)
    if not jnp.issubdtype(x.dtype, jnp.floating):
        x = x.astype(jnp.float32)
    B, N, D = x.shape
    itemsize = jnp.dtype(x.dtype).itemsize

    vmem_limit = _vmem_limit_bytes()
    tb, td, tn = _choose_tiles(B, N, D, itemsize, seq_tile, vmem_limit)
    nb, nd, nn = pl.cdiv(B, tb), pl.cdiv(D, td), pl.cdiv(N, tn)
    need_tail = (N % tn) != 0

    out_shape = jax.ShapeDtypeStruct((B, D), x.dtype)
    x_spec = pl.BlockSpec((tb, tn, td), lambda b, d, n: (b, n, d))
    o_spec = pl.BlockSpec((tb, td), lambda b, d, n: (b, d))
    scratch = [pltpu.VMEM((tb, td), jnp.float32)]
    cparams = pltpu.CompilerParams(
        dimension_semantics=("parallel", "parallel", "arbitrary"),
        vmem_limit_bytes=vmem_limit,
    )

    if mask is None:
        kernel = functools.partial(
            _mean_kernel, n_total=N, tn=tn, need_tail=need_tail)
        cost = pl.CostEstimate(
            flops=2 * B * N * D, transcendentals=0,
            bytes_accessed=B * N * D * itemsize + B * D * itemsize)
        return pl.pallas_call(
            kernel,
            out_shape=out_shape,
            grid_spec=pltpu.PrefetchScalarGridSpec(
                num_scalar_prefetch=0,
                grid=(nb, nd, nn),
                in_specs=[x_spec],
                out_specs=o_spec,
                scratch_shapes=scratch),
            compiler_params=cparams,
            cost_estimate=cost,
        )(x)

    mask = jnp.asarray(mask)
    # Lane-dense 2-D (B, N) f32 weights (1.0 where valid) and a tiny (B, 1)
    # precomputed reciprocal denominator, kept out of the hot loop.
    w2d = (1.0 - mask.astype(jnp.float32))            # (B, N)
    inv = 1.0 / jnp.sum(w2d, axis=1, keepdims=True)   # (B, 1)

    kernel = functools.partial(
        _masked_mean_kernel, n_total=N, tn=tn, need_tail=need_tail)
    w_spec = pl.BlockSpec((tb, tn), lambda b, d, n: (b, n))
    inv_spec = pl.BlockSpec((tb, 1), lambda b, d, n: (b, 0))
    cost = pl.CostEstimate(
        flops=3 * B * N * D, transcendentals=0,
        bytes_accessed=(B * N * D * itemsize + B * N * 4 * nd + B * 4
                        + B * D * itemsize))
    return pl.pallas_call(
        kernel,
        out_shape=out_shape,
        grid_spec=pltpu.PrefetchScalarGridSpec(
            num_scalar_prefetch=0,
            grid=(nb, nd, nn),
            in_specs=[x_spec, w_spec, inv_spec],
            out_specs=o_spec,
            scratch_shapes=scratch),
        compiler_params=cparams,
        cost_estimate=cost,
    )(x, w2d, inv)


# --------------------------- test --------------------------------------------

if __name__ == "__main__":
    key = jax.random.PRNGKey(0)
    k1, k2, k3, k4 = jax.random.split(key, 4)

    # Small shape consistent with the module (nodes=2, seq=8, hidden=32).
    B, N, D = 2, 8, 32
    x = jax.random.normal(k1, (B, N, D), dtype=jnp.float32)
    mask = jax.random.bernoulli(k2, p=0.3, shape=(B, N))
    mask = mask.at[:, 0].set(False)  # keep >= 1 valid token per row

    out_no_mask = global_avg_1d(x, None)
    out_masked = global_avg_1d(x, mask)
    jax.block_until_ready((out_no_mask, out_masked))

    ref_no_mask = x.mean(axis=1)
    wref = (~mask).astype(jnp.float32)[:, :, None]
    ref_masked = (x * wref).sum(axis=1) / wref.sum(axis=1)
    assert jnp.allclose(out_no_mask, ref_no_mask, atol=1e-5, rtol=1e-5)
    assert jnp.allclose(out_masked, ref_masked, atol=1e-5, rtol=1e-5)

    # Larger shape exercising the tiled grid + ragged N-tail path (tn=128,
    # tail of 72 rows) with the lane-dense 2-D mask block.
    B2, N2, D2 = 8, 200, 128
    x2 = jax.random.normal(k3, (B2, N2, D2), dtype=jnp.float32)
    mask2 = jax.random.bernoulli(k4, p=0.25, shape=(B2, N2))
    mask2 = mask2.at[:, 0].set(False)
    out2 = global_avg_1d(x2, mask2, seq_tile=128)
    jax.block_until_ready(out2)
    w2 = (~mask2).astype(jnp.float32)[:, :, None]
    ref2 = (x2 * w2).sum(axis=1) / w2.sum(axis=1)
    assert jnp.allclose(out2, ref2, atol=1e-4, rtol=1e-4)

    # bf16 stays bf16 end-to-end (no wrapper upcast), f32 accumulation inside.
    x3 = x2.astype(jnp.bfloat16)
    out3 = global_avg_1d(x3, None, seq_tile=128)
    jax.block_until_ready(out3)
    ref3 = x3.astype(jnp.float32).mean(axis=1)
    assert out3.dtype == jnp.bfloat16
    assert jnp.allclose(out3.astype(jnp.float32), ref3, atol=2e-2, rtol=2e-2)

    # D-split parallel axis path (nb == 1, D >= 256) + ragged final B block.
    B4, N4, D4 = 6, 300, 256
    x4 = jax.random.normal(k1, (B4, N4, D4), dtype=jnp.float32)
    mask4 = jax.random.bernoulli(k2, p=0.4, shape=(B4, N4))
    mask4 = mask4.at[:, 0].set(False)
    out4 = global_avg_1d(x4, mask4, seq_tile=128)
    jax.block_until_ready(out4)
    w4 = (~mask4).astype(jnp.float32)[:, :, None]
    ref4 = (x4 * w4).sum(axis=1) / w4.sum(axis=1)
    assert jnp.allclose(out4, ref4, atol=1e-4, rtol=1e-4)

    print("KERNEL_OK")
</pallas_src>

<mosaic_0001>
module attributes {stable_mosaic.version = 11 : i64} {
  func.func @_mean_kernel(%arg0: i32, %arg1: i32, %arg2: i32, %arg3: memref<2x8x32xf32, #tpu.memory_space<vmem>>, %arg4: memref<2x32xf32, #tpu.memory_space<vmem>>, %arg5: memref<2x32xf32, #tpu.memory_space<vmem>>) attributes {dimension_semantics = [#tpu.dimension_semantics<parallel>, #tpu.dimension_semantics<parallel>, #tpu.dimension_semantics<arbitrary>], iteration_bounds = array<i64: 1, 1, 1>, scalar_prefetch = 0 : i64, scratch_operands = 1 : i64, tpu.core_type = #tpu.core_type<tc>, window_params = [{transform_indices = @transform_0, window_bounds = array<i64: 2, 8, 32>}, {transform_indices = @transform_1, window_bounds = array<i64: 2, 32>}]} {
    %c0_i32 = arith.constant 0 : i32
    %0 = arith.cmpi eq, %arg2, %c0_i32 : i32
    %1 = arith.extui %0 : i1 to i32
    %c0_i32_0 = arith.constant 0 : i32
    %2 = arith.cmpi ne, %1, %c0_i32_0 : i32
    scf.if %2 {
      %cst_9 = arith.constant 0.000000e+00 : f32
      %11 = vector.broadcast %cst_9 : f32 to vector<2x32xf32>
      %c0_10 = arith.constant 0 : index
      %c0_11 = arith.constant 0 : index
      %12 = vector.load %arg5[%c0_10, %c0_11] : memref<2x32xf32, #tpu.memory_space<vmem>>, vector<2x32xf32>
      tpu.vector_store %arg5[%c0_10, %c0_11], %11 {strides = array<i32>} : memref<2x32xf32, #tpu.memory_space<vmem>>, vector<2x32xf32>,
    } else {
    }
    %c0 = arith.constant 0 : index
    %c0_1 = arith.constant 0 : index
    %c0_2 = arith.constant 0 : index
    %3 = vector.load %arg3[%c0, %c0_1, %c0_2] : memref<2x8x32xf32, #tpu.memory_space<vmem>>, vector<2x8x32xf32>
    %c0_3 = arith.constant 0 : index
    %c0_4 = arith.constant 0 : index
    %4 = vector.load %arg5[%c0_3, %c0_4] : memref<2x32xf32, #tpu.memory_space<vmem>>, vector<2x32xf32>
    %cst = arith.constant dense<0.000000e+00> : vector<2x32xf32>
    %5 = vector.multi_reduction <add>, %3, %cst [1] : vector<2x8x32xf32> to vector<2x32xf32>
    %6 = arith.addf %4, %5 : vector<2x32xf32>
    %c0_5 = arith.constant 0 : index
    %c0_6 = arith.constant 0 : index
    %7 = vector.load %arg5[%c0_5, %c0_6] : memref<2x32xf32, #tpu.memory_space<vmem>>, vector<2x32xf32>
    tpu.vector_store %arg5[%c0_5, %c0_6], %6 {strides = array<i32>} : memref<2x32xf32, #tpu.memory_space<vmem>>, vector<2x32xf32>,
    %c0_i32_7 = arith.constant 0 : i32
    %8 = arith.cmpi eq, %arg2, %c0_i32_7 : i32
    %9 = arith.extui %8 : i1 to i32
    %c0_i32_8 = arith.constant 0 : i32
    %10 = arith.cmpi ne, %9, %c0_i32_8 : i32
    scf.if %10 {
      %c0_9 = arith.constant 0 : index
      %c0_10 = arith.constant 0 : index
      %11 = vector.load %arg5[%c0_9, %c0_10] : memref<2x32xf32, #tpu.memory_space<vmem>>, vector<2x32xf32>
      %cst_11 = arith.constant 1.250000e-01 : f32
      %12 = vector.broadcast %cst_11 : f32 to vector<2x32xf32>
      %13 = arith.mulf %11, %12 : vector<2x32xf32>
      %c0_12 = arith.constant 0 : index
      %c0_13 = arith.constant 0 : index
      %14 = vector.load %arg4[%c0_12, %c0_13] : memref<2x32xf32, #tpu.memory_space<vmem>>, vector<2x32xf32>
      tpu.vector_store %arg4[%c0_12, %c0_13], %13 {strides = array<i32>} : memref<2x32xf32, #tpu.memory_space<vmem>>, vector<2x32xf32>,
    } else {
    }
    return
  }
  func.func @transform_0(%arg0: i32, %arg1: i32, %arg2: i32) -> (i32, i32, i32) {
    %c0_i32 = arith.constant 0 : i32
    return %arg0, %arg2, %arg1 : i32, i32, i32
  }
  func.func @transform_1(%arg0: i32, %arg1: i32, %arg2: i32) -> (i32, i32) {
    %c0_i32 = arith.constant 0 : i32
    return %arg0, %arg1 : i32, i32
  }
}

</mosaic_0001>

<llo_original>
// kernel: tpu_custom_call.1
$region0: #{tpu_custom_call.1}
  #allocation0 [shape = 'u32[]', space=smem, size = 0x4, offset = 0x4, fixed_abs, tag = 'smem constant byte address 0x4 - core index']
  #allocation1 [shape = 'u32[144,128]{1,0:T(1,128)}', space=vmem, size = 0x12000, scoped, tag = 'internal scratch']
  #allocation2 [shape = 'f32[2,32]{1,0:T(2,128)}', space=vmem, size = 0x400, scoped, tag = 'scratch operand']
  %s0 = inlined_call_operand.hbm [shape: f32[2,8,32], index: 0, kind: input, shape index: {}]
  %s1 = inlined_call_operand.hbm [shape: f32[2,32], index: 1, kind: output, shape index: {}]
  %s2 = sld [smem:[#allocation0]]
  $region26: #{tpu_custom_call.1} parent=0
    _
  %s4 = ssub.s32 1, %s2
  %s5 = scalar_select 0, %s4, %s2
  $region1: #{tpu_custom_call.1} parent=0
    #allocation3 [shape = 'u8[8192]{0}', space=vmem, size = 0x2000, scoped, tag = 'input window, operand 0, single buffered']
    #allocation4 [shape = 's32[1]{0}', space=sflag, size = 0x4, scoped, tag = 'scoped memory for tpu_custom_call.1']
    #allocation5 [shape = 's32[1]{0}', space=sflag, size = 0x4, scoped, tag = 'scoped memory for tpu_custom_call.1']
    #allocation6 [shape = 'u8[1024]{0}', space=vmem, size = 0x400, scoped, tag = 'output window, operand 0, single buffered']
    %6 = vsyncpa [#allocation4], 0
    %7 = vsyncpa [#allocation5], 0
    // Predicated region
    $region2: #{tpu_custom_call.1} parent=1 // pred_check
      _
    $region3: #{tpu_custom_call.1} parent=1 // pred_check_branch
      %9 = sbr.rel (0) target = $region5
    $region4: #{tpu_custom_call.1} parent=1 // pred_region
      %s11 = ssub.s32 256, 256
      %12 = vsyncadd [#allocation4], %s11
      %s13 = sshll.u32 [#allocation3], 4
      %s14 = int_to_ptr.vmem [resolvable:$true] %s13
      %19 = dma.hbm_to_vmem [thread:$0]  %s0, 256, %s14, [#allocation4], 128, 128, 8
    $region5: #{tpu_custom_call.1} parent=1 // pred_fallthru
      _
    // Predicated region
    $region6: #{tpu_custom_call.1} parent=1 // pred_check
      _
    $region7: #{tpu_custom_call.1} parent=1 // pred_check_branch
      %21 = sbr.rel (0) target = $region9
    $region8: #{tpu_custom_call.1} parent=1 // pred_region
      %22 = dma.done [#allocation4], 256
    $region9: #{tpu_custom_call.1} parent=1 // pred_fallthru
      _
    %p23 = scmp.eq.s32.totalorder 0, 0
    // Predicated region
    $region10: #{tpu_custom_call.1} parent=1 // pred_check
      %p24 = pneg %p23
    $region11: #{tpu_custom_call.1} parent=1 // pred_check_branch
      %26 = sbr.rel (%p24) target = $region13
    $region12: #{tpu_custom_call.1} parent=1 // pred_region
      %vm27 = vcmask 254976
      %28 = vst.msk [vmem:[#allocation2] sm:$0x3] %vm27, 0.0
    $region13: #{tpu_custom_call.1} parent=1 // pred_fallthru
      _
    %v29 = vld [vmem:[#allocation3] sm:$0xff]
    %v30 = vld [vmem:[#allocation3 + $0x8] sm:$0xff]
    %v31 = vld [vmem:[#allocation2] sm:$0x3]
    %vm32 = vcmask 261120
    %v33 = vsel %vm32, %v29, 0.0
    %v34 = vrot.slane %v33, 4
    %v35 = vadd.f32 %v33, %v34
    %v36 = vrot.slane %v35, 2
    %v37 = vadd.f32 %v35, %v36
    %v38 = vrot.slane %v37, 1
    %v39 = vadd.f32 %v37, %v38
    %v40 = vsel %vm32, %v30, 0.0
    %v41 = vrot.slane %v40, 4
    %v42 = vadd.f32 %v40, %v41
    %v43 = vrot.slane %v42, 2
    %v44 = vadd.f32 %v42, %v43
    %v45 = vrot.slane %v44, 1
    %v46 = vadd.f32 %v44, %v45
    %vm49 = vcmask 1041409
    %v50 = vsel %vm49, %v46, %v39
    %v52 = vadd.f32 %v31, %v50
    %vm53 = vcmask 254976
    %54 = vst.msk [vmem:[#allocation2] sm:$0x3] %vm53, %v52
    // Predicated region
    $region14: #{tpu_custom_call.1} parent=1 // pred_check
      %p55 = pneg %p23
    $region15: #{tpu_custom_call.1} parent=1 // pred_check_branch
      %57 = sbr.rel (%p55) target = $region17
    $region16: #{tpu_custom_call.1} parent=1 // pred_region
      %v58 = vld [vmem:[#allocation2] sm:$0x3]
      %v59 = vmul.f32 %v58, 0.125
      %60 = vst.msk [vmem:[#allocation6] sm:$0x3] %vm53, %v59
    $region17: #{tpu_custom_call.1} parent=1 // pred_fallthru
      _
    // Predicated region
    $region18: #{tpu_custom_call.1} parent=1 // pred_check
      _
    $region19: #{tpu_custom_call.1} parent=1 // pred_check_branch
      %62 = sbr.rel (0) target = $region21
    $region20: #{tpu_custom_call.1} parent=1 // pred_region
      %s64 = ssub.s32 32, 32
      %65 = vsyncadd [#allocation5], %s64
      %s67 = sshll.u32 [#allocation6], 4
      %s68 = int_to_ptr.vmem [resolvable:$true] %s67
      %70 = dma.vmem_to_hbm [thread:$0]  %s68, 32, %s1, [#allocation5]
    $region21: #{tpu_custom_call.1} parent=1 // pred_fallthru
      _
    // Predicated region
    $region22: #{tpu_custom_call.1} parent=1 // pred_check
      _
    $region23: #{tpu_custom_call.1} parent=1 // pred_check_branch
      %72 = sbr.rel (0) target = $region25
    $region24: #{tpu_custom_call.1} parent=1 // pred_region
      %73 = dma.done [#allocation5], 32
    $region25: #{tpu_custom_call.1} parent=1 // pred_fallthru
      _
    %74 = vsyncpa [#allocation4], 1
    %75 = vsyncpa [#allocation5], 1

</llo_original>
